<compile_context>
chip_gen: v7x
topology: tpu7x:2x2x1
jax: 0.10.0
libtpu: 0.0.40
codegen_flags: <defaults>
</compile_context>

<pallas_src>
import jax
import jax.numpy as jnp
import numpy as np
from jax.experimental import pallas as pl
from jax.experimental.pallas import tpu as pltpu

_NEG_FILL = np.float32(-1e30)  # finite: exp(pad - m) == 0, 0 * finite == 0


def ebam_kernel(x_ref, w1t_ref, b1_ref, w2t_ref, b2_ref, o_ref):
    # x_ref: (Bt, C, HWp) activation slab.
    x = x_ref[...].astype(jnp.float32)

    # Stable softmax statistics + algebraic base-2 entropy:
    #   p = e / s, log p = (x - m) - log s
    #   H = -sum(p log p) = log(s) - sum(e * (x - m)) / s       (natural log)
    m = jnp.max(x, axis=-1, keepdims=True)            # (Bt, C, 1)
    xm = x - m                                         # (Bt, C, HWp)
    e = jnp.exp(xm)                                    # (Bt, C, HWp)
    s = jnp.sum(e, axis=-1)                            # (Bt, C)
    t = jnp.sum(e * xm, axis=-1)                       # (Bt, C)
    inv_ln2 = np.float32(1.0 / np.log(2.0))
    entropy = (jnp.log(s) - t / s) * inv_ln2           # (Bt, C) lane-dense row

    # Two tiny MXU matmuls (the module has no activation between its Linears).
    h = jnp.dot(entropy, w1t_ref[...],
                preferred_element_type=jnp.float32) + b1_ref[...]      # (Bt, Cr)
    logits = jnp.dot(h, w2t_ref[...],
                     preferred_element_type=jnp.float32) + b2_ref[...]  # (Bt, C)
    att = jax.nn.sigmoid(logits)                        # (Bt, C)

    # Re-read X from VMEM for the final per-channel scale (short live range).
    o_ref[...] = (x_ref[...].astype(jnp.float32)
                  * att[:, :, None]).astype(o_ref.dtype)


def channel_ebam_ref(x, w1, b1, w2, b2):
    """Pure-JAX reference mirroring the PyTorch forward (un-fused MLP)."""
    B, C, H, W = x.shape
    xf = x.reshape(B, C, H * W)
    p = jax.nn.softmax(xf, axis=-1)
    logp = jax.nn.log_softmax(xf, axis=-1)
    entropy = -(p * logp).sum(-1) / np.log(2.0)         # (B, C) base-2 entropy
    h = entropy @ w1.T + b1                              # (B, Cr)
    a = h @ w2.T + b2                                    # (B, C)
    att = jax.nn.sigmoid(a)[:, :, None, None]
    return x * att


def _vmem_ceiling_bytes():
    """Usable VMEM ceiling derived from the local TPU generation."""
    try:
        cap = int(pltpu.get_tpu_info().vmem_capacity_bytes)
    except Exception:  # noqa: BLE001 - assume the smallest known VMEM (v7x)
        cap = 64 << 20
    # ~51 MiB usable on v7x (64 MiB physical), ~102 MiB on v5e/v6e (128 MiB):
    # leave headroom for compiler internal scratch, semaphores and pipeline
    # bookkeeping instead of requesting all of physical VMEM.
    return min(int(0.8 * cap), cap - (8 << 20))


def channel_ebam(x, w1, b1, w2, b2):
    """x: (B, C, H, W). w1: (Cr, C), b1: (Cr,), w2: (C, Cr), b2: (C,)
    in PyTorch nn.Linear (out, in) layout."""
    B, C, H, W = x.shape
    Cr = w1.shape[0]
    HW = H * W
    itemsize = np.dtype(x.dtype).itemsize

    # Lane-dense weights for the in-kernel matmuls (rows along lanes).
    w1t = jnp.asarray(w1, jnp.float32).T               # (C, Cr)
    w2t = jnp.asarray(w2, jnp.float32).T               # (Cr, C)
    b1r = jnp.asarray(b1, jnp.float32).reshape(1, Cr)
    b2r = jnp.asarray(b2, jnp.float32).reshape(1, C)
    # Assume worst case (double-buffered) weight residency for budgeting.
    weight_bytes = 2 * 4 * (w1t.size + w2t.size + b1r.size + b2r.size)

    # Pad H*W to a multiple of 128 so loads / stores stay lane-dense.
    HWp = ((HW + 127) // 128) * 128
    x_flat = x.reshape(B, C, HW)
    if HWp != HW:
        x_flat = jnp.pad(x_flat, ((0, 0), (0, 0), (0, HWp - HW)),
                         constant_values=_NEG_FILL)

    slab = C * HWp * itemsize                           # bytes per batch row

    # Block budget: double-buffered in + out (4x) plus ~3-4 full-block live
    # intermediates in the entropy pass  ->  ~8x block bytes.
    vmem_ceiling = _vmem_ceiling_bytes()
    block_budget = max((vmem_ceiling - weight_bytes - (1 << 20)) // 8,
                       512 << 10)

    if slab > block_budget:
        # TODO(synk): tiled-entropy (flash-style m/s/t over HW chunks) +
        # tiled-scale Pallas path; fall back to plain XLA for now.
        return channel_ebam_ref(x, w1, b1, w2, b2)

    # Batch tile: as large as the budget allows, but keep >= 2 grid steps so
    # both v7x TensorCores get work (negligible extra cost on v5e/v6e).
    bt = int(max(1, min(block_budget // slab, B)))
    if B >= 2:
        bt = min(bt, pl.cdiv(B, 2))
    num_blocks = pl.cdiv(B, bt)                         # ragged last block OK

    block_bytes = bt * slab
    vmem_need = 8 * block_bytes + weight_bytes + (1 << 20)
    vmem_limit = int(min(max(vmem_need, 32 << 20), vmem_ceiling))

    cost = pl.CostEstimate(
        flops=int(6 * B * C * HWp + 4 * B * C * Cr),
        transcendentals=int(B * C * HWp + 2 * B * C),
        bytes_accessed=int(2 * B * C * HWp * itemsize + weight_bytes),
    )

    def build(single_buffer_weights):
        def const_spec(shape):
            n = len(shape)

            def idx(i):
                return (0,) * n

            if single_buffer_weights:
                # Constant index_map: one VMEM buffer is enough.
                return pl.BlockSpec(shape, idx, pipeline_mode=pl.Buffered(1))
            return pl.BlockSpec(shape, idx)

        return pl.pallas_call(
            ebam_kernel,
            out_shape=jax.ShapeDtypeStruct((B, C, HWp), x.dtype),
            grid_spec=pltpu.PrefetchScalarGridSpec(
                num_scalar_prefetch=0,
                grid=(num_blocks,),
                in_specs=[
                    pl.BlockSpec((bt, C, HWp), lambda i: (i, 0, 0)),  # X slab
                    const_spec((C, Cr)),                              # W1^T
                    const_spec((1, Cr)),                              # b1
                    const_spec((Cr, C)),                              # W2^T
                    const_spec((1, C)),                               # b2
                ],
                out_specs=pl.BlockSpec((bt, C, HWp), lambda i: (i, 0, 0)),
            ),
            compiler_params=pltpu.CompilerParams(
                dimension_semantics=("parallel",),
                vmem_limit_bytes=vmem_limit),
            cost_estimate=cost,
        )

    try:
        out_flat = build(True)(x_flat, w1t, b1r, w2t, b2r)
    except Exception:  # noqa: BLE001 - pipeline_mode unsupported: retry default
        out_flat = build(False)(x_flat, w1t, b1r, w2t, b2r)

    if HWp != HW:
        out_flat = out_flat[:, :, :HW]
    return out_flat.reshape(B, C, H, W)


if __name__ == "__main__":
    B, C, H, W = 2, 4, 16, 16
    reduction_ratio = 2
    Cr = C // reduction_ratio

    key = jax.random.PRNGKey(0)
    kx, kw1, kb1, kw2, kb2 = jax.random.split(key, 5)

    x = jax.random.normal(kx, (B, C, H, W), dtype=jnp.float32)
    # Deterministic synthetic parameters (PyTorch nn.Linear layout: (out, in)).
    w1 = jax.random.normal(kw1, (Cr, C), dtype=jnp.float32) * 0.5
    b1 = jax.random.normal(kb1, (Cr,), dtype=jnp.float32) * 0.1
    w2 = jax.random.normal(kw2, (C, Cr), dtype=jnp.float32) * 0.5
    b2 = jax.random.normal(kb2, (C,), dtype=jnp.float32) * 0.1

    out = channel_ebam(x, w1, b1, w2, b2)
    out = jax.block_until_ready(out)

    ref = channel_ebam_ref(x, w1, b1, w2, b2)
    np.testing.assert_allclose(np.asarray(out), np.asarray(ref),
                               rtol=1e-4, atol=1e-4)
    print("KERNEL_OK")
</pallas_src>

<mosaic_0001>
module attributes {stable_mosaic.version = 11 : i64} {
  func.func @ebam_kernel(%arg0: i32, %arg1: memref<1x4x256xf32, #tpu.memory_space<vmem>>, %arg2: memref<4x2xf32, #tpu.memory_space<vmem>>, %arg3: memref<1x2xf32, #tpu.memory_space<vmem>>, %arg4: memref<2x4xf32, #tpu.memory_space<vmem>>, %arg5: memref<1x4xf32, #tpu.memory_space<vmem>>, %arg6: memref<1x4x256xf32, #tpu.memory_space<vmem>>) attributes {dimension_semantics = [#tpu.dimension_semantics<parallel>], iteration_bounds = array<i64: 2>, scalar_prefetch = 0 : i64, scratch_operands = 0 : i64, tpu.core_type = #tpu.core_type<tc>, window_params = [{transform_indices = @transform_0, window_bounds = array<i64: 1, 4, 256>}, {pipeline_mode = #tpu.pipeline_mode<synchronous>, transform_indices = @transform_1, window_bounds = array<i64: 4, 2>}, {pipeline_mode = #tpu.pipeline_mode<synchronous>, transform_indices = @transform_2, window_bounds = array<i64: 1, 2>}, {pipeline_mode = #tpu.pipeline_mode<synchronous>, transform_indices = @transform_3, window_bounds = array<i64: 2, 4>}, {pipeline_mode = #tpu.pipeline_mode<synchronous>, transform_indices = @transform_4, window_bounds = array<i64: 1, 4>}, {transform_indices = @transform_5, window_bounds = array<i64: 1, 4, 256>}]} {
    %c0 = arith.constant 0 : index
    %c0_0 = arith.constant 0 : index
    %c0_1 = arith.constant 0 : index
    %0 = vector.load %arg1[%c0, %c0_0, %c0_1] : memref<1x4x256xf32, #tpu.memory_space<vmem>>, vector<1x4x256xf32>
    %cst = arith.constant dense<0xFF800000> : vector<1x4xf32>
    %1 = vector.multi_reduction <maximumf>, %0, %cst [2] : vector<1x4x256xf32> to vector<1x4xf32>
    %2 = vector.shape_cast %1 : vector<1x4xf32> to vector<1x4x1xf32>
    %3 = vector.broadcast %2 : vector<1x4x1xf32> to vector<1x4x256xf32>
    %4 = arith.subf %0, %3 : vector<1x4x256xf32>
    %5 = math.exp %4 : vector<1x4x256xf32>
    %cst_2 = arith.constant dense<0.000000e+00> : vector<1x4xf32>
    %6 = vector.multi_reduction <add>, %5, %cst_2 [2] : vector<1x4x256xf32> to vector<1x4xf32>
    %7 = arith.mulf %5, %4 : vector<1x4x256xf32>
    %cst_3 = arith.constant dense<0.000000e+00> : vector<1x4xf32>
    %8 = vector.multi_reduction <add>, %7, %cst_3 [2] : vector<1x4x256xf32> to vector<1x4xf32>
    %9 = math.log %6 : vector<1x4xf32>
    %10 = arith.divf %8, %6 : vector<1x4xf32>
    %11 = arith.subf %9, %10 : vector<1x4xf32>
    %cst_4 = arith.constant 1.44269502 : f32
    %12 = vector.broadcast %cst_4 : f32 to vector<1x4xf32>
    %13 = arith.mulf %11, %12 : vector<1x4xf32>
    %c0_5 = arith.constant 0 : index
    %c0_6 = arith.constant 0 : index
    %14 = vector.load %arg2[%c0_5, %c0_6] : memref<4x2xf32, #tpu.memory_space<vmem>>, vector<4x2xf32>
    %cst_7 = arith.constant dense<0.000000e+00> : vector<1x2xf32>
    %15 = tpu.matmul %13, %14, %cst_7 {dimension_numbers = #tpu.dot_dimension_numbers<[1], [0], [0], [1], [0, 0, 1, 1], [], []>} : vector<1x4xf32>, vector<4x2xf32>, vector<1x2xf32> -> vector<1x2xf32>
    %c0_8 = arith.constant 0 : index
    %c0_9 = arith.constant 0 : index
    %16 = vector.load %arg3[%c0_8, %c0_9] : memref<1x2xf32, #tpu.memory_space<vmem>>, vector<1x2xf32>
    %17 = arith.addf %15, %16 : vector<1x2xf32>
    %c0_10 = arith.constant 0 : index
    %c0_11 = arith.constant 0 : index
    %18 = vector.load %arg4[%c0_10, %c0_11] : memref<2x4xf32, #tpu.memory_space<vmem>>, vector<2x4xf32>
    %cst_12 = arith.constant dense<0.000000e+00> : vector<1x4xf32>
    %19 = tpu.matmul %17, %18, %cst_12 {dimension_numbers = #tpu.dot_dimension_numbers<[1], [0], [0], [1], [0, 0, 1, 1], [], []>} : vector<1x2xf32>, vector<2x4xf32>, vector<1x4xf32> -> vector<1x4xf32>
    %c0_13 = arith.constant 0 : index
    %c0_14 = arith.constant 0 : index
    %20 = vector.load %arg5[%c0_13, %c0_14] : memref<1x4xf32, #tpu.memory_space<vmem>>, vector<1x4xf32>
    %21 = arith.addf %19, %20 : vector<1x4xf32>
    %22 = arith.negf %21 : vector<1x4xf32>
    %23 = math.exp %22 : vector<1x4xf32>
    %cst_15 = arith.constant 1.000000e+00 : f32
    %24 = vector.broadcast %cst_15 : f32 to vector<1x4xf32>
    %25 = arith.addf %24, %23 : vector<1x4xf32>
    %26 = arith.divf %24, %25 : vector<1x4xf32>
    %c0_16 = arith.constant 0 : index
    %c0_17 = arith.constant 0 : index
    %c0_18 = arith.constant 0 : index
    %27 = vector.load %arg1[%c0_16, %c0_17, %c0_18] : memref<1x4x256xf32, #tpu.memory_space<vmem>>, vector<1x4x256xf32>
    %28 = vector.shape_cast %26 : vector<1x4xf32> to vector<1x4x1xf32>
    %29 = vector.broadcast %28 : vector<1x4x1xf32> to vector<1x4x256xf32>
    %30 = arith.mulf %27, %29 : vector<1x4x256xf32>
    %c0_19 = arith.constant 0 : index
    %c0_20 = arith.constant 0 : index
    %c0_21 = arith.constant 0 : index
    %31 = vector.load %arg6[%c0_19, %c0_20, %c0_21] : memref<1x4x256xf32, #tpu.memory_space<vmem>>, vector<1x4x256xf32>
    tpu.vector_store %arg6[%c0_19, %c0_20, %c0_21], %30 {strides = array<i32>} : memref<1x4x256xf32, #tpu.memory_space<vmem>>, vector<1x4x256xf32>,
    return
  }
  func.func @transform_0(%arg0: i32) -> (i32, i32, i32) {
    %c0_i32 = arith.constant 0 : i32
    %c0_i32_0 = arith.constant 0 : i32
    %c0_i32_1 = arith.constant 0 : i32
    return %arg0, %c0_i32, %c0_i32_0 : i32, i32, i32
  }
  func.func @transform_1(%arg0: i32) -> (i32, i32) {
    %c0_i32 = arith.constant 0 : i32
    %c0_i32_0 = arith.constant 0 : i32
    %c0_i32_1 = arith.constant 0 : i32
    return %c0_i32, %c0_i32_0 : i32, i32
  }
  func.func @transform_2(%arg0: i32) -> (i32, i32) {
    %c0_i32 = arith.constant 0 : i32
    %c0_i32_0 = arith.constant 0 : i32
    %c0_i32_1 = arith.constant 0 : i32
    return %c0_i32, %c0_i32_0 : i32, i32
  }
  func.func @transform_3(%arg0: i32) -> (i32, i32) {
    %c0_i32 = arith.constant 0 : i32
    %c0_i32_0 = arith.constant 0 : i32
    %c0_i32_1 = arith.constant 0 : i32
    return %c0_i32, %c0_i32_0 : i32, i32
  }
  func.func @transform_4(%arg0: i32) -> (i32, i32) {
    %c0_i32 = arith.constant 0 : i32
    %c0_i32_0 = arith.constant 0 : i32
    %c0_i32_1 = arith.constant 0 : i32
    return %c0_i32, %c0_i32_0 : i32, i32
  }
  func.func @transform_5(%arg0: i32) -> (i32, i32, i32) {
    %c0_i32 = arith.constant 0 : i32
    %c0_i32_0 = arith.constant 0 : i32
    %c0_i32_1 = arith.constant 0 : i32
    return %arg0, %c0_i32, %c0_i32_0 : i32, i32, i32
  }
}

module attributes {stable_mosaic.version = 11 : i64} {
  func.func @ebam_kernel(%arg0: i32, %arg1: memref<1x4x256xf32, #tpu.memory_space<vmem>>, %arg2: memref<4x2xf32, #tpu.memory_space<vmem>>, %arg3: memref<1x2xf32, #tpu.memory_space<vmem>>, %arg4: memref<2x4xf32, #tpu.memory_space<vmem>>, %arg5: memref<1x4xf32, #tpu.memory_space<vmem>>, %arg6: memref<1x4x256xf32, #tpu.memory_space<vmem>>) attributes {dimension_semantics = [#tpu.dimension_semantics<parallel>], iteration_bounds = array<i64: 2>, scalar_prefetch = 0 : i64, scratch_operands = 0 : i64, tpu.core_type = #tpu.core_type<tc>, window_params = [{transform_indices = @transform_0, window_bounds = array<i64: 1, 4, 256>}, {pipeline_mode = #tpu.pipeline_mode<synchronous>, transform_indices = @transform_1, window_bounds = array<i64: 4, 2>}, {pipeline_mode = #tpu.pipeline_mode<synchronous>, transform_indices = @transform_2, window_bounds = array<i64: 1, 2>}, {pipeline_mode = #tpu.pipeline_mode<synchronous>, transform_indices = @transform_3, window_bounds = array<i64: 2, 4>}, {pipeline_mode = #tpu.pipeline_mode<synchronous>, transform_indices = @transform_4, window_bounds = array<i64: 1, 4>}, {transform_indices = @transform_5, window_bounds = array<i64: 1, 4, 256>}]} {
    %c0 = arith.constant 0 : index
    %c0_0 = arith.constant 0 : index
    %c0_1 = arith.constant 0 : index
    %0 = vector.load %arg1[%c0, %c0_0, %c0_1] : memref<1x4x256xf32, #tpu.memory_space<vmem>>, vector<1x4x256xf32>
    %cst = arith.constant dense<0xFF800000> : vector<1x4xf32>
    %1 = vector.multi_reduction <maximumf>, %0, %cst [2] : vector<1x4x256xf32> to vector<1x4xf32>
    %2 = vector.shape_cast %1 : vector<1x4xf32> to vector<1x4x1xf32>
    %3 = vector.broadcast %2 : vector<1x4x1xf32> to vector<1x4x256xf32>
    %4 = arith.subf %0, %3 : vector<1x4x256xf32>
    %5 = math.exp %4 : vector<1x4x256xf32>
    %cst_2 = arith.constant dense<0.000000e+00> : vector<1x4xf32>
    %6 = vector.multi_reduction <add>, %5, %cst_2 [2] : vector<1x4x256xf32> to vector<1x4xf32>
    %7 = arith.mulf %5, %4 : vector<1x4x256xf32>
    %cst_3 = arith.constant dense<0.000000e+00> : vector<1x4xf32>
    %8 = vector.multi_reduction <add>, %7, %cst_3 [2] : vector<1x4x256xf32> to vector<1x4xf32>
    %9 = math.log %6 : vector<1x4xf32>
    %10 = arith.divf %8, %6 : vector<1x4xf32>
    %11 = arith.subf %9, %10 : vector<1x4xf32>
    %cst_4 = arith.constant 1.44269502 : f32
    %12 = vector.broadcast %cst_4 : f32 to vector<1x4xf32>
    %13 = arith.mulf %11, %12 : vector<1x4xf32>
    %c0_5 = arith.constant 0 : index
    %c0_6 = arith.constant 0 : index
    %14 = vector.load %arg2[%c0_5, %c0_6] : memref<4x2xf32, #tpu.memory_space<vmem>>, vector<4x2xf32>
    %cst_7 = arith.constant dense<0.000000e+00> : vector<1x2xf32>
    %15 = tpu.matmul %13, %14, %cst_7 {dimension_numbers = #tpu.dot_dimension_numbers<[1], [0], [0], [1], [0, 0, 1, 1], [], []>} : vector<1x4xf32>, vector<4x2xf32>, vector<1x2xf32> -> vector<1x2xf32>
    %c0_8 = arith.constant 0 : index
    %c0_9 = arith.constant 0 : index
    %16 = vector.load %arg3[%c0_8, %c0_9] : memref<1x2xf32, #tpu.memory_space<vmem>>, vector<1x2xf32>
    %17 = arith.addf %15, %16 : vector<1x2xf32>
    %c0_10 = arith.constant 0 : index
    %c0_11 = arith.constant 0 : index
    %18 = vector.load %arg4[%c0_10, %c0_11] : memref<2x4xf32, #tpu.memory_space<vmem>>, vector<2x4xf32>
    %cst_12 = arith.constant dense<0.000000e+00> : vector<1x4xf32>
    %19 = tpu.matmul %17, %18, %cst_12 {dimension_numbers = #tpu.dot_dimension_numbers<[1], [0], [0], [1], [0, 0, 1, 1], [], []>} : vector<1x2xf32>, vector<2x4xf32>, vector<1x4xf32> -> vector<1x4xf32>
    %c0_13 = arith.constant 0 : index
    %c0_14 = arith.constant 0 : index
    %20 = vector.load %arg5[%c0_13, %c0_14] : memref<1x4xf32, #tpu.memory_space<vmem>>, vector<1x4xf32>
    %21 = arith.addf %19, %20 : vector<1x4xf32>
    %22 = arith.negf %21 : vector<1x4xf32>
    %23 = math.exp %22 : vector<1x4xf32>
    %cst_15 = arith.constant 1.000000e+00 : f32
    %24 = vector.broadcast %cst_15 : f32 to vector<1x4xf32>
    %25 = arith.addf %24, %23 : vector<1x4xf32>
    %26 = arith.divf %24, %25 : vector<1x4xf32>
    %c0_16 = arith.constant 0 : index
    %c0_17 = arith.constant 0 : index
    %c0_18 = arith.constant 0 : index
    %27 = vector.load %arg1[%c0_16, %c0_17, %c0_18] : memref<1x4x256xf32, #tpu.memory_space<vmem>>, vector<1x4x256xf32>
    %28 = vector.shape_cast %26 : vector<1x4xf32> to vector<1x4x1xf32>
    %29 = vector.broadcast %28 : vector<1x4x1xf32> to vector<1x4x256xf32>
    %30 = arith.mulf %27, %29 : vector<1x4x256xf32>
    %c0_19 = arith.constant 0 : index
    %c0_20 = arith.constant 0 : index
    %c0_21 = arith.constant 0 : index
    %31 = vector.load %arg6[%c0_19, %c0_20, %c0_21] : memref<1x4x256xf32, #tpu.memory_space<vmem>>, vector<1x4x256xf32>
    tpu.vector_store %arg6[%c0_19, %c0_20, %c0_21], %30 {strides = array<i32>} : memref<1x4x256xf32, #tpu.memory_space<vmem>>, vector<1x4x256xf32>,
    return
  }
  func.func @transform_0(%arg0: i32) -> (i32, i32, i32) {
    %c0_i32 = arith.constant 0 : i32
    %c0_i32_0 = arith.constant 0 : i32
    %c0_i32_1 = arith.constant 0 : i32
    return %arg0, %c0_i32, %c0_i32_0 : i32, i32, i32
  }
  func.func @transform_1(%arg0: i32) -> (i32, i32) {
    %c0_i32 = arith.constant 0 : i32
    %c0_i32_0 = arith.constant 0 : i32
    %c0_i32_1 = arith.constant 0 : i32
    return %c0_i32, %c0_i32_0 : i32, i32
  }
  func.func @transform_2(%arg0: i32) -> (i32, i32) {
    %c0_i32 = arith.constant 0 : i32
    %c0_i32_0 = arith.constant 0 : i32
    %c0_i32_1 = arith.constant 0 : i32
    return %c0_i32, %c0_i32_0 : i32, i32
  }
  func.func @transform_3(%arg0: i32) -> (i32, i32) {
    %c0_i32 = arith.constant 0 : i32
    %c0_i32_0 = arith.constant 0 : i32
    %c0_i32_1 = arith.constant 0 : i32
    return %c0_i32, %c0_i32_0 : i32, i32
  }
  func.func @transform_4(%arg0: i32) -> (i32, i32) {
    %c0_i32 = arith.constant 0 : i32
    %c0_i32_0 = arith.constant 0 : i32
    %c0_i32_1 = arith.constant 0 : i32
    return %c0_i32, %c0_i32_0 : i32, i32
  }
  func.func @transform_5(%arg0: i32) -> (i32, i32, i32) {
    %c0_i32 = arith.constant 0 : i32
    %c0_i32_0 = arith.constant 0 : i32
    %c0_i32_1 = arith.constant 0 : i32
    return %arg0, %c0_i32, %c0_i32_0 : i32, i32, i32
  }
}

</mosaic_0001>

<llo_original>
// kernel: tpu_custom_call.1
$region0: #{tpu_custom_call.1}
  #allocation0 [shape = 'u32[]', space=smem, size = 0x4, offset = 0x4, fixed_abs, tag = 'smem constant byte address 0x4 - core index']
  #allocation1 [shape = 'u32[144,128]{1,0:T(1,128)}', space=vmem, size = 0x12000, scoped, tag = 'internal scratch']
  %s0 = inlined_call_operand.hbm [shape: f32[2,4,256], index: 0, kind: input, shape index: {}]
  %s1 = inlined_call_operand.vmem [shape: f32[4,2], index: 1, kind: input, shape index: {}]
  %s2 = inlined_call_operand.vmem [shape: f32[1,2], index: 2, kind: input, shape index: {}]
  %s3 = inlined_call_operand.vmem [shape: f32[2,4], index: 3, kind: input, shape index: {}]
  %s4 = inlined_call_operand.vmem [shape: f32[1,4], index: 4, kind: input, shape index: {}]
  %s5 = inlined_call_operand.hbm [shape: f32[2,4,256], index: 5, kind: output, shape index: {}]
  %s6 = sld [smem:[#allocation0]]
  $region57: #{tpu_custom_call.1} parent=0
    _
  %s8 = ssub.s32 1, %s6
  %s9 = scalar_select 0, %s8, %s6
  $region1: #{tpu_custom_call.1} parent=0
    #allocation2 [shape = 'u8[8192]{0}', space=vmem, size = 0x2000, scoped, tag = 'input window, operand 0']
    #allocation3 [shape = 's32[2]{0}', space=sflag, size = 0x8, scoped, tag = 'scoped memory for tpu_custom_call.1']
    #allocation4 [shape = 's32[2]{0}', space=sflag, size = 0x8, scoped, tag = 'scoped memory for tpu_custom_call.1']
    #allocation5 [shape = 'u8[8192]{0}', space=vmem, size = 0x2000, scoped, tag = 'output window, operand 0']
    %10 = vsyncpa [#allocation3], 0
    %s11 = scalar_lea.sflag [#allocation3], 1
    %12 = vsyncpa %s11, 0
    %13 = vsyncpa [#allocation4], 0
    %s14 = scalar_lea.sflag [#allocation4], 1
    %15 = vsyncpa %s14, 0
    loop: start=0, step=1, limit=4
    $region2: #{tpu_custom_call.1} parent=1 // loop_pre_header
      _
    $region3: #{tpu_custom_call.1} parent=1 // loop_header
      %s17 = sphi 0, %s21
      %p18 = scmp.ge.s32.totalorder %s17, 4
      %s27 = sphi 0, %s29
      %s30 = sphi 0, %s27
      %s31 = sphi 0, %s30
      %s47 = sphi 0, %s31
      %s51 = sphi 0, %s51
      %s53 = sphi 0, %s51
      %s54 = sphi 0, %s53
      %s68 = sphi 0, %s54
      %s72 = sphi 0, %s72
      %s74 = sphi 0, %s72
      %s75 = sphi 0, %s74
      %s89 = sphi 0, %s75
      %s93 = sphi 0, %s93
      %s95 = sphi 0, %s93
      %s96 = sphi 0, %s95
      %s110 = sphi 0, %s96
      %s114 = sphi 0, %s114
      %s116 = sphi 0, %s114
      %s117 = sphi 0, %s116
      %s131 = sphi 0, %s117
      %s137 = sphi 0, %s139
      %s140 = sphi 0, %s137
      %s141 = sphi 0, %s140
      %s157 = sphi 0, %s141
    $region4: #{tpu_custom_call.1} parent=1 // loop_header_branch
      %20 = sbr.rel (%p18) target = $region8
    $region5: #{tpu_custom_call.1} parent=1 // loop_body
      %s22 = ssub.s32 %s17, 1
      %s23 = ssub.s32 %s17, 2
      %s24 = sadd.s32 %s17, 1
      %s25 = ssub.s32 %s17, %s24
      %p26 = scmp.eq.s32.totalorder %s25, 0
      %s28 = sadd.s32 %s27, 1
      %s29 = scalar_select %p26, %s27, %s28
      %p32 = pneg %p26
      %p33 = scmp.eq.s32.totalorder %s17, 1
      %p34 = por %p32, %p33
      %p35 = scmp.ne.s32.totalorder %s27, %s30
      %p36 = scmp.eq.s32.totalorder %s17, 0
      %p37 = por %p35, %p36
      %p38 = scmp.ne.s32.totalorder %s27, %s30
      %p39 = scmp.eq.s32.totalorder %s22, 1
      %p40 = por %p38, %p39
      %p41 = scmp.ne.s32.totalorder %s30, %s31
      %p42 = scmp.eq.s32.totalorder %s22, 0
      %p43 = por %p41, %p42
      %p44 = scmp.ne.s32.totalorder %s30, %s31
      %p45 = scmp.eq.s32.totalorder %s23, 1
      %p46 = por %p44, %p45
      %p48 = scmp.ne.s32.totalorder %s31, %s47
      %p49 = scmp.eq.s32.totalorder %s23, 0
      %p50 = por %p48, %p49
      %s52 = sadd.s32 %s51, 1
      %p55 = scmp.eq.s32.totalorder %s17, 1
      %p56 = scmp.ne.s32.totalorder %s51, %s53
      %p57 = scmp.eq.s32.totalorder %s17, 0
      %p58 = por %p56, %p57
      %p59 = scmp.ne.s32.totalorder %s51, %s53
      %p60 = scmp.eq.s32.totalorder %s22, 1
      %p61 = por %p59, %p60
      %p62 = scmp.ne.s32.totalorder %s53, %s54
      %p63 = scmp.eq.s32.totalorder %s22, 0
      %p64 = por %p62, %p63
      %p65 = scmp.ne.s32.totalorder %s53, %s54
      %p66 = scmp.eq.s32.totalorder %s23, 1
      %p67 = por %p65, %p66
      %p69 = scmp.ne.s32.totalorder %s54, %s68
      %p70 = scmp.eq.s32.totalorder %s23, 0
      %p71 = por %p69, %p70
      %s73 = sadd.s32 %s72, 1
      %p76 = scmp.eq.s32.totalorder %s17, 1
      %p77 = scmp.ne.s32.totalorder %s72, %s74
      %p78 = scmp.eq.s32.totalorder %s17, 0
      %p79 = por %p77, %p78
      %p80 = scmp.ne.s32.totalorder %s72, %s74
      %p81 = scmp.eq.s32.totalorder %s22, 1
      %p82 = por %p80, %p81
      %p83 = scmp.ne.s32.totalorder %s74, %s75
      %p84 = scmp.eq.s32.totalorder %s22, 0
      %p85 = por %p83, %p84
      %p86 = scmp.ne.s32.totalorder %s74, %s75
      %p87 = scmp.eq.s32.totalorder %s23, 1
      %p88 = por %p86, %p87
      %p90 = scmp.ne.s32.totalorder %s75, %s89
      %p91 = scmp.eq.s32.totalorder %s23, 0
      %p92 = por %p90, %p91
      %s94 = sadd.s32 %s93, 1
      %p97 = scmp.eq.s32.totalorder %s17, 1
      %p98 = scmp.ne.s32.totalorder %s93, %s95
      %p99 = scmp.eq.s32.totalorder %s17, 0
      %p100 = por %p98, %p99
      %p101 = scmp.ne.s32.totalorder %s93, %s95
      %p102 = scmp.eq.s32.totalorder %s22, 1
      %p103 = por %p101, %p102
      %p104 = scmp.ne.s32.totalorder %s95, %s96
      %p105 = scmp.eq.s32.totalorder %s22, 0
      %p106 = por %p104, %p105
      %p107 = scmp.ne.s32.totalorder %s95, %s96
      %p108 = scmp.eq.s32.totalorder %s23, 1
      %p109 = por %p107, %p108
      %p111 = scmp.ne.s32.totalorder %s96, %s110
      %p112 = scmp.eq.s32.totalorder %s23, 0
      %p113 = por %p111, %p112
      %s115 = sadd.s32 %s114, 1
      %p118 = scmp.eq.s32.totalorder %s17, 1
      %p119 = scmp.ne.s32.totalorder %s114, %s116
      %p120 = scmp.eq.s32.totalorder %s17, 0
      %p121 = por %p119, %p120
      %p122 = scmp.ne.s32.totalorder %s114, %s116
      %p123 = scmp.eq.s32.totalorder %s22, 1
      %p124 = por %p122, %p123
      %p125 = scmp.ne.s32.totalorder %s116, %s117
      %p126 = scmp.eq.s32.totalorder %s22, 0
      %p127 = por %p125, %p126
      %p128 = scmp.ne.s32.totalorder %s116, %s117
      %p129 = scmp.eq.s32.totalorder %s23, 1
      %p130 = por %p128, %p129
      %p132 = scmp.ne.s32.totalorder %s117, %s131
      %p133 = scmp.eq.s32.totalorder %s23, 0
      %p134 = por %p132, %p133
      %s135 = ssub.s32 %s17, %s24
      %p136 = scmp.eq.s32.totalorder %s135, 0
      %s138 = sadd.s32 %s137, 1
      %s139 = scalar_select %p136, %s137, %s138
      %p142 = pneg %p136
      %p143 = scmp.eq.s32.totalorder %s17, 1
      %p144 = por %p142, %p143
      %p145 = scmp.ne.s32.totalorder %s137, %s140
      %p146 = scmp.eq.s32.totalorder %s17, 0
      %p147 = por %p145, %p146
      %p148 = scmp.ne.s32.totalorder %s137, %s140
      %p149 = scmp.eq.s32.totalorder %s22, 1
      %p150 = por %p148, %p149
      %p151 = scmp.ne.s32.totalorder %s140, %s141
      %p152 = scmp.eq.s32.totalorder %s22, 0
      %p153 = por %p151, %p152
      %p154 = scmp.ne.s32.totalorder %s140, %s141
      %p155 = scmp.eq.s32.totalorder %s23, 1
      %p156 = por %p154, %p155
      %p158 = scmp.ne.s32.totalorder %s141, %s157
      %p159 = scmp.eq.s32.totalorder %s23, 0
      %p160 = por %p158, %p159
      %p161 = scmp.le.s32.totalorder 1, %s17
      %p162 = scmp.lt.s32.totalorder %s17, 3
      %p163 = pnand %p161, %p162
      %p164 = pneg %p163
      // Predicated region
      $region9: #{tpu_custom_call.1} parent=5 // pred_check
        _
      $region10: #{tpu_custom_call.1} parent=5 // pred_check_branch
        %166 = sbr.rel (%p163) target = $region12
      $region11: #{tpu_custom_call.1} parent=5 // pred_region
        %s167 = ssub.s32 %s17, 1
        // Predicated region
        $region13: #{tpu_custom_call.1} parent=11 // pred_check
          %p168 = pneg %p64
        $region14: #{tpu_custom_call.1} parent=11 // pred_check_branch
          %170 = sbr.rel (%p168) target = $region16
        $region15: #{tpu_custom_call.1} parent=11 // pred_region
          _
        $region16: #{tpu_custom_call.1} parent=11 // pred_fallthru
          _
        // Predicated region
        $region17: #{tpu_custom_call.1} parent=11 // pred_check
          %p171 = pneg %p85
        $region18: #{tpu_custom_call.1} parent=11 // pred_check_branch
          %173 = sbr.rel (%p171) target = $region20
        $region19: #{tpu_custom_call.1} parent=11 // pred_region
          _
        $region20: #{tpu_custom_call.1} parent=11 // pred_fallthru
          _
        // Predicated region
        $region21: #{tpu_custom_call.1} parent=11 // pred_check
          %p174 = pneg %p106
        $region22: #{tpu_custom_call.1} parent=11 // pred_check_branch
          %176 = sbr.rel (%p174) target = $region24
        $region23: #{tpu_custom_call.1} parent=11 // pred_region
          _
        $region24: #{tpu_custom_call.1} parent=11 // pred_fallthru
          _
        // Predicated region
        $region25: #{tpu_custom_call.1} parent=11 // pred_check
          %p177 = pneg %p127
        $region26: #{tpu_custom_call.1} parent=11 // pred_check_branch
          %179 = sbr.rel (%p177) target = $region28
        $region27: #{tpu_custom_call.1} parent=11 // pred_region
          _
        $region28: #{tpu_custom_call.1} parent=11 // pred_fallthru
          _
      $region12: #{tpu_custom_call.1} parent=5 // pred_fallthru
        _
      %p180 = scmp.lt.s32.totalorder %s17, 2
      // Predicated region
      $region29: #{tpu_custom_call.1} parent=5 // pred_check
        %p181 = pneg %p180
      $region30: #{tpu_custom_call.1} parent=5 // pred_check_branch
        %183 = sbr.rel (%p181) target = $region32
      $region31: #{tpu_custom_call.1} parent=5 // pred_region
        // Predicated region
        $region33: #{tpu_custom_call.1} parent=31 // pred_check
          %p184 = pneg %p37
        $region34: #{tpu_custom_call.1} parent=31 // pred_check_branch
          %186 = sbr.rel (%p184) target = $region36
        $region35: #{tpu_custom_call.1} parent=31 // pred_region
          %s187 = sand.u32 %s27, 1
          %s188 = scalar_lea.sflag [#allocation3], %s187
          %s189 = sand.u32 %s27, 1
          %s190 = smul.addr %s189, 8
          %s191 = scalar_lea.vmem [#allocation2], %s190
          %s193 = ssub.s32 128, 128
          %194 = vsyncadd %s188, %s193
          %s195 = smul.addr %s17, 2
          %s196 = smul.addr %s195, 64
          %s197 = scalar_lea.hbm %s0, %s196
          %s199 = sshll.u32 %s191, 4
          %s200 = int_to_ptr.vmem [resolvable:$true] %s199
          %202 = dma.hbm_to_vmem [thread:$0]  %s197, 128, %s200, %s188
        $region36: #{tpu_custom_call.1} parent=31 // pred_fallthru
          _
      $region32: #{tpu_custom_call.1} parent=5 // pred_fallthru
        _
      %p203 = scmp.le.s32.totalorder 1, %s17
      %p204 = scmp.lt.s32.totalorder %s17, 3
      %p205 = pnand %p203, %p204
      %p206 = pneg %p205
      // Predicated region
      $region37: #{tpu_custom_call.1} parent=5 // pred_check
        _
      $region38: #{tpu_custom_call.1} parent=5 // pred_check_branch
        %208 = sbr.rel (%p205) target = $region40
      $region39: #{tpu_custom_call.1} parent=5 // pred_region
        %s209 = ssub.s32 %s17, 1
        %s210 = sand.u32 %s30, 1
        %s211 = scalar_lea.sflag [#allocation3], %s210
        %s212 = sand.u32 %s30, 1
        %s213 = smul.addr %s212, 8
        %s214 = scalar_lea.vmem [#allocation2], %s213
        // Predicated region
        $region41: #{tpu_custom_call.1} parent=39 // pred_check
          %p215 = pneg %p43
        $region42: #{tpu_custom_call.1} parent=39 // pred_check_branch
          %217 = sbr.rel (%p215) target = $region44
        $region43: #{tpu_custom_call.1} parent=39 // pred_region
          %218 = dma.done %s211, 128
        $region44: #{tpu_custom_call.1} parent=39 // pred_fallthru
          _
        %s219 = sand.u32 %s30, 1
        %s220 = scalar_lea.sflag [#allocation3], %s219
        %s221 = sand.u32 %s30, 1
        %s222 = smul.addr %s221, 8
        %s223 = scalar_lea.vmem [#allocation2], %s222
        %p224 = pneg %p43
        %p225 = pneg %p40
        %p226 = pneg %p64
        %p227 = pneg %p61
        %p228 = pneg %p85
        %p229 = pneg %p82
        %p230 = pneg %p106
        %p231 = pneg %p103
        %p232 = pneg %p127
        %p233 = pneg %p124
        %p234 = pneg %p153
        %p235 = pneg %p150
        %s236 = sand.u32 %s140, 1
        %s237 = scalar_lea.sflag [#allocation4], %s236
        %s238 = sand.u32 %s140, 1
        %s239 = smul.addr %s238, 8
        %s240 = scalar_lea.vmem [#allocation5], %s239
        %v241 = vld [vmem:[%s214] sm:$0xff]
        %v243 = vcombine.high %v241, %v241
        %vm245 = vcmask 1043456
        %v246 = vsel %vm245, %v241, -inf
        %v247 = vsel %vm245, %v243, -inf
        %v248 = vmax.f32 %v246, %v247
        %249 = vmax.xlane.f32.xlu0 %v248
        %v250 = vpop.xlane.xlu0 %249
        %v253 = vunpack.c.l.s4 839922192
        %v254 = vunpack.c.0.s8 %v253
        %v255 = vlaneseq
        %v256 = vshrl.u32 %v255, 7
        %v257 = vsub.s32 %v254, %v256
        %v258 = vrot.slane %v250, %v257
        %v260 = vsub.f32 %v241, %v258
        %v261 = vmul.f32 %v260, 1.442695
        %v262 = vpow.pop %v261
        %v264 = vcombine.high %v262, %v262
        %v266 = vsel %vm245, %v262, 0.0
        %v267 = vsel %vm245, %v264, 0.0
        %v268 = vadd.f32 %v266, %v267
        %269 = vadd.xlane.f32.xlu0 %v268
        %v270 = vpop.xlane.xlu0 %269
        %v271 = vmul.f32 %v262, %v260
        %v273 = vcombine.high %v271, %v271
        %v275 = vsel %vm245, %v271, 0.0
        %v276 = vsel %vm245, %v273, 0.0
        %v277 = vadd.f32 %v275, %v276
        %278 = vadd.xlane.f32.xlu0 %v277
        %v279 = vpop.xlane.xlu0 %278
        %v280 = vlog2.pop %v270
        %v281 = vmul.f32 %v280, 0.6931472
        %v282 = vrcp.pop %v270
        %v283 = vmul.f32 %v279, %v282
        %v284 = vsub.f32 %v281, %v283
        %v285 = vmul.f32 %v284, 1.442695
        %v286 = vld [vmem:[%s1] sm:$0xf]
        %v287 = vld [vmem:[%s2] sm:$0x1]
        %v289 = vlaneseq
        %v290 = vand.u32 %v289, 127
        %v291 = vlaneseq
        %v292 = vshrl.u32 %v291, 7
        %v293 = vsub.s32 %v290, %v292
        %v294 = vrot.slane %v285, %v293
        %vm295 = vcmask 31744
        %v296 = vsel %vm295, %v294, 0
        %v299 = vsel %vm245, %v286, 0
        %301 = vmatprep.subr.mxu0 0.0
        %302 = vmatpush1.msra.mxu0 %v299
        %303 = vmatprep.subr.mxu0 0.0
        %304 = vmatpush1.msra.mxu0 0.0
        %305 = vmatprep.subr.mxu0 0.0
        %306 = vmatpush1.msra.mxu0 0.0
        %307 = vmatprep.subr.mxu0 0.0
        %308 = vmatpush1.msra.mxu0 0.0
        %309 = vmatprep.subr.mxu0 0.0
        %310 = vmatpush1.msra.mxu0 0.0
        %311 = vmatprep.subr.mxu0 0.0
        %312 = vmatpush1.msra.mxu0 0.0
        %313 = vmatprep.subr.mxu0 0.0
        %314 = vmatpush1.msra.mxu0 0.0
        %315 = vmatprep.subr.mxu0 0.0
        %316 = vmatpush1.msra.mxu0 0.0
        %317 = vmatprep.subr.mxu0 0.0
        %318 = vmatpush1.msra.mxu0 0.0
        %319 = vmatprep.subr.mxu0 0.0
        %320 = vmatpush1.msra.mxu0 0.0
        %321 = vmatprep.subr.mxu0 0.0
        %322 = vmatpush1.msra.mxu0 0.0
        %323 = vmatprep.subr.mxu0 0.0
        %324 = vmatpush1.msra.mxu0 0.0
        %325 = vmatprep.subr.mxu0 0.0
        %326 = vmatpush1.msra.mxu0 0.0
        %327 = vmatprep.subr.mxu0 0.0
        %328 = vmatpush1.msra.mxu0 0.0
        %329 = vmatprep.subr.mxu0 0.0
        %330 = vmatpush1.msra.mxu0 0.0
        %331 = vmatprep.subr.mxu0 0.0
        %332 = vmatpush1.msra.mxu0 0.0
        %333 = vmatprep.subr.mxu0 0.0
        %334 = vmatpush1.msra.mxu0 0.0
        %335 = vmatprep.subr.mxu0 0.0
        %336 = vmatpush1.msra.mxu0 0.0
        %337 = vmatprep.subr.mxu0 0.0
        %338 = vmatpush1.msra.mxu0 0.0
        %339 = vmatprep.subr.mxu0 0.0
        %340 = vmatpush1.msra.mxu0 0.0
        %341 = vmatprep.subr.mxu0 0.0
        %342 = vmatpush1.msra.mxu0 0.0
        %343 = vmatprep.subr.mxu0 0.0
        %344 = vmatpush1.msra.mxu0 0.0
        %345 = vmatprep.subr.mxu0 0.0
        %346 = vmatpush1.msra.mxu0 0.0
        %347 = vmatprep.subr.mxu0 0.0
        %348 = vmatpush1.msra.mxu0 0.0
        %349 = vmatprep.subr.mxu0 0.0
        %350 = vmatpush1.msra.mxu0 0.0
        %351 = vmatprep.subr.mxu0 0.0
        %352 = vmatpush1.msra.mxu0 0.0
        %353 = vmatprep.subr.mxu0 0.0
        %354 = vmatpush1.msra.mxu0 0.0
        %355 = vmatprep.subr.mxu0 0.0
        %356 = vmatpush1.msra.mxu0 0.0
        %357 = vmatprep.subr.mxu0 0.0
        %358 = vmatpush1.msra.mxu0 0.0
        %359 = vmatprep.subr.mxu0 0.0
        %360 = vmatpush1.msra.mxu0 0.0
        %361 = vmatprep.subr.mxu0 0.0
        %362 = vmatpush1.msra.mxu0 0.0
        %363 = vmatprep.subr.mxu0 0.0
        %364 = vmatpush1.msra.mxu0 0.0
        %365 = vmatprep.mubr.f32.mxu0 0.0
        %366 = vmatmul.mubr.f32.gmra.mrb[0].mxu0 %v296
        %v367 = vpop.f32.mrb[0].mxu0
        %v368 = vadd.f32 %v287, %v367
        %v369 = vpop.f32.mrb[0].mxu0
        %370 = vdwg.mxu0
        %v371 = vld [vmem:[%s3] sm:$0x3]
        %v372 = vld [vmem:[%s4] sm:$0x1]
        %vm373 = vcmask 15360
        %v375 = vsel %vm373, %v368, 0
        %vm377 = vcmask 1041408
        %v379 = vsel %vm377, %v371, 0
        %381 = vmatprep.subr.mxu0 0.0
        %382 = vmatpush1.msra.mxu0 %v379
        %383 = vmatprep.subr.mxu0 0.0
        %384 = vmatpush1.msra.mxu0 0.0
        %385 = vmatprep.subr.mxu0 0.0
        %386 = vmatpush1.msra.mxu0 0.0
        %387 = vmatprep.subr.mxu0 0.0
        %388 = vmatpush1.msra.mxu0 0.0
        %389 = vmatprep.subr.mxu0 0.0
        %390 = vmatpush1.msra.mxu0 0.0
        %391 = vmatprep.subr.mxu0 0.0
        %392 = vmatpush1.msra.mxu0 0.0
        %393 = vmatprep.subr.mxu0 0.0
        %394 = vmatpush1.msra.mxu0 0.0
        %395 = vmatprep.subr.mxu0 0.0
        %396 = vmatpush1.msra.mxu0 0.0
        %397 = vmatprep.subr.mxu0 0.0
        %398 = vmatpush1.msra.mxu0 0.0
        %399 = vmatprep.subr.mxu0 0.0
        %400 = vmatpush1.msra.mxu0 0.0
        %401 = vmatprep.subr.mxu0 0.0
        %402 = vmatpush1.msra.mxu0 0.0
        %403 = vmatprep.subr.mxu0 0.0
        %404 = vmatpush1.msra.mxu0 0.0
        %405 = vmatprep.subr.mxu0 0.0
        %406 = vmatpush1.msra.mxu0 0.0
        %407 = vmatprep.subr.mxu0 0.0
        %408 = vmatpush1.msra.mxu0 0.0
        %409 = vmatprep.subr.mxu0 0.0
        %410 = vmatpush1.msra.mxu0 0.0
        %411 = vmatprep.subr.mxu0 0.0
        %412 = vmatpush1.msra.mxu0 0.0
        %413 = vmatprep.subr.mxu0 0.0
        %414 = vmatpush1.msra.mxu0 0.0
        %415 = vmatprep.subr.mxu0 0.0
        %416 = vmatpush1.msra.mxu0 0.0
        %417 = vmatprep.subr.mxu0 0.0
        %418 = vmatpush1.msra.mxu0 0.0
        %419 = vmatprep.subr.mxu0 0.0
        %420 = vmatpush1.msra.mxu0 0.0
        %421 = vmatprep.subr.mxu0 0.0
        %422 = vmatpush1.msra.mxu0 0.0
        %423 = vmatprep.subr.mxu0 0.0
        %424 = vmatpush1.msra.mxu0 0.0
        %425 = vmatprep.subr.mxu0 0.0
        %426 = vmatpush1.msra.mxu0 0.0
        %427 = vmatprep.subr.mxu0 0.0
        %428 = vmatpush1.msra.mxu0 0.0
        %429 = vmatprep.subr.mxu0 0.0
        %430 = vmatpush1.msra.mxu0 0.0
        %431 = vmatprep.subr.mxu0 0.0
        %432 = vmatpush1.msra.mxu0 0.0
        %433 = vmatprep.subr.mxu0 0.0
        %434 = vmatpush1.msra.mxu0 0.0
        %435 = vmatprep.subr.mxu0 0.0
        %436 = vmatpush1.msra.mxu0 0.0
        %437 = vmatprep.subr.mxu0 0.0
        %438 = vmatpush1.msra.mxu0 0.0
        %439 = vmatprep.subr.mxu0 0.0
        %440 = vmatpush1.msra.mxu0 0.0
        %441 = vmatprep.subr.mxu0 0.0
        %442 = vmatpush1.msra.mxu0 0.0
        %443 = vmatprep.subr.mxu0 0.0
        %444 = vmatpush1.msra.mxu0 0.0
        %445 = vmatprep.mubr.f32.mxu0 0.0
        %446 = vmatmul.mubr.f32.gmra.mrb[0].mxu0 %v375
        %v447 = vpop.f32.mrb[0].mxu0
        %v448 = vadd.f32 %v372, %v447
        %v449 = vpop.f32.mrb[0].mxu0
        %450 = vdwg.mxu0
        %v451 = vxor.u32 %v448, 2147483648
        %v452 = vmul.f32 %v451, 1.442695
        %v453 = vpow.pop %v452
        %v454 = vadd.f32 %v453, 1.0
        %v455 = vrcp.pop %v454
        %v456 = vmul.f32 1.0, %v455
        %v457 = vlaneseq
        %v458 = vshrl.u32 %v457, 7
        %v459 = vsub.s32 0, %v458
        %v460 = vrot.slane %v456, %v459
        %462 = vbcast.lane.b32.xlu0 %v460, 256
        %v463 = vpop.permute.xlu0 %462
        %v466 = vunpack.c.l.s4 839922192
        %v467 = vunpack.c.0.s8 %v466
        %v468 = vlaneseq
        %v469 = vshrl.u32 %v468, 7
        %v470 = vsub.s32 %v467, %v469
        %v471 = vrot.slane %v463, %v470
        %v473 = vmul.f32 %v241, %v471
        %474 = vst [vmem:[%s240] sm:$0xff] %v473
        %s475 = sand.u32 %s140, 1
        %s476 = scalar_lea.sflag [#allocation4], %s475
        %s477 = sand.u32 %s140, 1
        %s478 = smul.addr %s477, 8
        %s479 = scalar_lea.vmem [#allocation5], %s478
        // Predicated region
        $region45: #{tpu_custom_call.1} parent=39 // pred_check
          %p480 = pneg %p150
        $region46: #{tpu_custom_call.1} parent=39 // pred_check_branch
          %482 = sbr.rel (%p480) target = $region48
        $region47: #{tpu_custom_call.1} parent=39 // pred_region
          %s484 = ssub.s32 128, 128
          %485 = vsyncadd %s476, %s484
          %s486 = smul.addr %s22, 2
          %s487 = smul.addr %s486, 64
          %s488 = scalar_lea.hbm %s5, %s487
          %s490 = sshll.u32 %s479, 4
          %s491 = int_to_ptr.vmem [resolvable:$true] %s490
          %493 = dma.vmem_to_hbm [thread:$0]  %s491, 128, %s488, %s476
        $region48: #{tpu_custom_call.1} parent=39 // pred_fallthru
          _
      $region40: #{tpu_custom_call.1} parent=5 // pred_fallthru
        _
      %p494 = scmp.le.s32.totalorder 2, %s17
      // Predicated region
      $region49: #{tpu_custom_call.1} parent=5 // pred_check
        %p495 = pneg %p494
      $region50: #{tpu_custom_call.1} parent=5 // pred_check_branch
        %497 = sbr.rel (%p495) target = $region52
      $region51: #{tpu_custom_call.1} parent=5 // pred_region
        %s498 = ssub.s32 %s17, 2
        // Predicated region
        $region53: #{tpu_custom_call.1} parent=51 // pred_check
          %p499 = pneg %p156
        $region54: #{tpu_custom_call.1} parent=51 // pred_check_branch
          %501 = sbr.rel (%p499) target = $region56
        $region55: #{tpu_custom_call.1} parent=51 // pred_region
          %s502 = sand.u32 %s141, 1
          %s503 = scalar_lea.sflag [#allocation4], %s502
          %s504 = sand.u32 %s141, 1
          %s505 = smul.addr %s504, 8
          %s506 = scalar_lea.vmem [#allocation5], %s505
          %507 = dma.done %s503, 128
        $region56: #{tpu_custom_call.1} parent=51 // pred_fallthru
          _
      $region52: #{tpu_custom_call.1} parent=5 // pred_fallthru
        _
    $region6: #{tpu_custom_call.1} parent=1 // loop_footer
      %s21 = sadd.s32 1, %s17
    $region7: #{tpu_custom_call.1} parent=1 // loop_footer_branch
      %16 = sbr.rel target = $region3
    $region8: #{tpu_custom_call.1} parent=1 // loop_exit
      _
    %508 = vsyncpa [#allocation3], 1
    %s509 = scalar_lea.sflag [#allocation3], 1
    %510 = vsyncpa %s509, 1
    %511 = vsyncpa [#allocation4], 1
    %s512 = scalar_lea.sflag [#allocation4], 1
    %513 = vsyncpa %s512, 1

// kernel: tpu_custom_call.1
$region0: #{tpu_custom_call.1}
  #allocation0 [shape = 'u32[]', space=smem, size = 0x4, offset = 0x4, fixed_abs, tag = 'smem constant byte address 0x4 - core index']
  #allocation1 [shape = 'u32[144,128]{1,0:T(1,128)}', space=vmem, size = 0x12000, scoped, tag = 'internal scratch']
  %s0 = inlined_call_operand.hbm [shape: f32[2,4,256], index: 0, kind: input, shape index: {}]
  %s1 = inlined_call_operand.vmem [shape: f32[4,2], index: 1, kind: input, shape index: {}]
  %s2 = inlined_call_operand.vmem [shape: f32[1,2], index: 2, kind: input, shape index: {}]
  %s3 = inlined_call_operand.vmem [shape: f32[2,4], index: 3, kind: input, shape index: {}]
  %s4 = inlined_call_operand.vmem [shape: f32[1,4], index: 4, kind: input, shape index: {}]
  %s5 = inlined_call_operand.hbm [shape: f32[2,4,256], index: 5, kind: output, shape index: {}]
  %s6 = sld [smem:[#allocation0]]
  $region57: #{tpu_custom_call.1} parent=0
    _
  %s8 = ssub.s32 1, %s6
  %s9 = scalar_select 0, %s8, %s6
  $region1: #{tpu_custom_call.1} parent=0
    #allocation2 [shape = 'u8[8192]{0}', space=vmem, size = 0x2000, scoped, tag = 'input window, operand 0']
    #allocation3 [shape = 's32[2]{0}', space=sflag, size = 0x8, scoped, tag = 'scoped memory for tpu_custom_call.1']
    #allocation4 [shape = 's32[2]{0}', space=sflag, size = 0x8, scoped, tag = 'scoped memory for tpu_custom_call.1']
    #allocation5 [shape = 'u8[8192]{0}', space=vmem, size = 0x2000, scoped, tag = 'output window, operand 0']
    %10 = vsyncpa [#allocation3], 0
    %s11 = scalar_lea.sflag [#allocation3], 1
    %12 = vsyncpa %s11, 0
    %13 = vsyncpa [#allocation4], 0
    %s14 = scalar_lea.sflag [#allocation4], 1
    %15 = vsyncpa %s14, 0
    loop: start=0, step=1, limit=4
    $region2: #{tpu_custom_call.1} parent=1 // loop_pre_header
      _
    $region3: #{tpu_custom_call.1} parent=1 // loop_header
      %s17 = sphi 0, %s21
      %p18 = scmp.ge.s32.totalorder %s17, 4
      %s27 = sphi 0, %s29
      %s30 = sphi 0, %s27
      %s31 = sphi 0, %s30
      %s47 = sphi 0, %s31
      %s51 = sphi 0, %s51
      %s53 = sphi 0, %s51
      %s54 = sphi 0, %s53
      %s68 = sphi 0, %s54
      %s72 = sphi 0, %s72
      %s74 = sphi 0, %s72
      %s75 = sphi 0, %s74
      %s89 = sphi 0, %s75
      %s93 = sphi 0, %s93
      %s95 = sphi 0, %s93
      %s96 = sphi 0, %s95
      %s110 = sphi 0, %s96
      %s114 = sphi 0, %s114
      %s116 = sphi 0, %s114
      %s117 = sphi 0, %s116
      %s131 = sphi 0, %s117
      %s137 = sphi 0, %s139
      %s140 = sphi 0, %s137
      %s141 = sphi 0, %s140
      %s157 = sphi 0, %s141
    $region4: #{tpu_custom_call.1} parent=1 // loop_header_branch
      %20 = sbr.rel (%p18) target = $region8
    $region5: #{tpu_custom_call.1} parent=1 // loop_body
      %s22 = ssub.s32 %s17, 1
      %s23 = ssub.s32 %s17, 2
      %s24 = sadd.s32 %s17, 1
      %s25 = ssub.s32 %s17, %s24
      %p26 = scmp.eq.s32.totalorder %s25, 0
      %s28 = sadd.s32 %s27, 1
      %s29 = scalar_select %p26, %s27, %s28
      %p32 = pneg %p26
      %p33 = scmp.eq.s32.totalorder %s17, 1
      %p34 = por %p32, %p33
      %p35 = scmp.ne.s32.totalorder %s27, %s30
      %p36 = scmp.eq.s32.totalorder %s17, 0
      %p37 = por %p35, %p36
      %p38 = scmp.ne.s32.totalorder %s27, %s30
      %p39 = scmp.eq.s32.totalorder %s22, 1
      %p40 = por %p38, %p39
      %p41 = scmp.ne.s32.totalorder %s30, %s31
      %p42 = scmp.eq.s32.totalorder %s22, 0
      %p43 = por %p41, %p42
      %p44 = scmp.ne.s32.totalorder %s30, %s31
      %p45 = scmp.eq.s32.totalorder %s23, 1
      %p46 = por %p44, %p45
      %p48 = scmp.ne.s32.totalorder %s31, %s47
      %p49 = scmp.eq.s32.totalorder %s23, 0
      %p50 = por %p48, %p49
      %s52 = sadd.s32 %s51, 1
      %p55 = scmp.eq.s32.totalorder %s17, 1
      %p56 = scmp.ne.s32.totalorder %s51, %s53
      %p57 = scmp.eq.s32.totalorder %s17, 0
      %p58 = por %p56, %p57
      %p59 = scmp.ne.s32.totalorder %s51, %s53
      %p60 = scmp.eq.s32.totalorder %s22, 1
      %p61 = por %p59, %p60
      %p62 = scmp.ne.s32.totalorder %s53, %s54
      %p63 = scmp.eq.s32.totalorder %s22, 0
      %p64 = por %p62, %p63
      %p65 = scmp.ne.s32.totalorder %s53, %s54
      %p66 = scmp.eq.s32.totalorder %s23, 1
      %p67 = por %p65, %p66
      %p69 = scmp.ne.s32.totalorder %s54, %s68
      %p70 = scmp.eq.s32.totalorder %s23, 0
      %p71 = por %p69, %p70
      %s73 = sadd.s32 %s72, 1
      %p76 = scmp.eq.s32.totalorder %s17, 1
      %p77 = scmp.ne.s32.totalorder %s72, %s74
      %p78 = scmp.eq.s32.totalorder %s17, 0
      %p79 = por %p77, %p78
      %p80 = scmp.ne.s32.totalorder %s72, %s74
      %p81 = scmp.eq.s32.totalorder %s22, 1
      %p82 = por %p80, %p81
      %p83 = scmp.ne.s32.totalorder %s74, %s75
      %p84 = scmp.eq.s32.totalorder %s22, 0
      %p85 = por %p83, %p84
      %p86 = scmp.ne.s32.totalorder %s74, %s75
      %p87 = scmp.eq.s32.totalorder %s23, 1
      %p88 = por %p86, %p87
      %p90 = scmp.ne.s32.totalorder %s75, %s89
      %p91 = scmp.eq.s32.totalorder %s23, 0
      %p92 = por %p90, %p91
      %s94 = sadd.s32 %s93, 1
      %p97 = scmp.eq.s32.totalorder %s17, 1
      %p98 = scmp.ne.s32.totalorder %s93, %s95
      %p99 = scmp.eq.s32.totalorder %s17, 0
      %p100 = por %p98, %p99
      %p101 = scmp.ne.s32.totalorder %s93, %s95
      %p102 = scmp.eq.s32.totalorder %s22, 1
      %p103 = por %p101, %p102
      %p104 = scmp.ne.s32.totalorder %s95, %s96
      %p105 = scmp.eq.s32.totalorder %s22, 0
      %p106 = por %p104, %p105
      %p107 = scmp.ne.s32.totalorder %s95, %s96
      %p108 = scmp.eq.s32.totalorder %s23, 1
      %p109 = por %p107, %p108
      %p111 = scmp.ne.s32.totalorder %s96, %s110
      %p112 = scmp.eq.s32.totalorder %s23, 0
      %p113 = por %p111, %p112
      %s115 = sadd.s32 %s114, 1
      %p118 = scmp.eq.s32.totalorder %s17, 1
      %p119 = scmp.ne.s32.totalorder %s114, %s116
      %p120 = scmp.eq.s32.totalorder %s17, 0
      %p121 = por %p119, %p120
      %p122 = scmp.ne.s32.totalorder %s114, %s116
      %p123 = scmp.eq.s32.totalorder %s22, 1
      %p124 = por %p122, %p123
      %p125 = scmp.ne.s32.totalorder %s116, %s117
      %p126 = scmp.eq.s32.totalorder %s22, 0
      %p127 = por %p125, %p126
      %p128 = scmp.ne.s32.totalorder %s116, %s117
      %p129 = scmp.eq.s32.totalorder %s23, 1
      %p130 = por %p128, %p129
      %p132 = scmp.ne.s32.totalorder %s117, %s131
      %p133 = scmp.eq.s32.totalorder %s23, 0
      %p134 = por %p132, %p133
      %s135 = ssub.s32 %s17, %s24
      %p136 = scmp.eq.s32.totalorder %s135, 0
      %s138 = sadd.s32 %s137, 1
      %s139 = scalar_select %p136, %s137, %s138
      %p142 = pneg %p136
      %p143 = scmp.eq.s32.totalorder %s17, 1
      %p144 = por %p142, %p143
      %p145 = scmp.ne.s32.totalorder %s137, %s140
      %p146 = scmp.eq.s32.totalorder %s17, 0
      %p147 = por %p145, %p146
      %p148 = scmp.ne.s32.totalorder %s137, %s140
      %p149 = scmp.eq.s32.totalorder %s22, 1
      %p150 = por %p148, %p149
      %p151 = scmp.ne.s32.totalorder %s140, %s141
      %p152 = scmp.eq.s32.totalorder %s22, 0
      %p153 = por %p151, %p152
      %p154 = scmp.ne.s32.totalorder %s140, %s141
      %p155 = scmp.eq.s32.totalorder %s23, 1
      %p156 = por %p154, %p155
      %p158 = scmp.ne.s32.totalorder %s141, %s157
      %p159 = scmp.eq.s32.totalorder %s23, 0
      %p160 = por %p158, %p159
      %p161 = scmp.le.s32.totalorder 1, %s17
      %p162 = scmp.lt.s32.totalorder %s17, 3
      %p163 = pnand %p161, %p162
      %p164 = pneg %p163
      // Predicated region
      $region9: #{tpu_custom_call.1} parent=5 // pred_check
        _
      $region10: #{tpu_custom_call.1} parent=5 // pred_check_branch
        %166 = sbr.rel (%p163) target = $region12
      $region11: #{tpu_custom_call.1} parent=5 // pred_region
        %s167 = ssub.s32 %s17, 1
        // Predicated region
        $region13: #{tpu_custom_call.1} parent=11 // pred_check
          %p168 = pneg %p64
        $region14: #{tpu_custom_call.1} parent=11 // pred_check_branch
          %170 = sbr.rel (%p168) target = $region16
        $region15: #{tpu_custom_call.1} parent=11 // pred_region
          _
        $region16: #{tpu_custom_call.1} parent=11 // pred_fallthru
          _
        // Predicated region
        $region17: #{tpu_custom_call.1} parent=11 // pred_check
          %p171 = pneg %p85
        $region18: #{tpu_custom_call.1} parent=11 // pred_check_branch
          %173 = sbr.rel (%p171) target = $region20
        $region19: #{tpu_custom_call.1} parent=11 // pred_region
          _
        $region20: #{tpu_custom_call.1} parent=11 // pred_fallthru
          _
        // Predicated region
        $region21: #{tpu_custom_call.1} parent=11 // pred_check
          %p174 = pneg %p106
        $region22: #{tpu_custom_call.1} parent=11 // pred_check_branch
          %176 = sbr.rel (%p174) target = $region24
        $region23: #{tpu_custom_call.1} parent=11 // pred_region
          _
        $region24: #{tpu_custom_call.1} parent=11 // pred_fallthru
          _
        // Predicated region
        $region25: #{tpu_custom_call.1} parent=11 // pred_check
          %p177 = pneg %p127
        $region26: #{tpu_custom_call.1} parent=11 // pred_check_branch
          %179 = sbr.rel (%p177) target = $region28
        $region27: #{tpu_custom_call.1} parent=11 // pred_region
          _
        $region28: #{tpu_custom_call.1} parent=11 // pred_fallthru
          _
      $region12: #{tpu_custom_call.1} parent=5 // pred_fallthru
        _
      %p180 = scmp.lt.s32.totalorder %s17, 2
      // Predicated region
      $region29: #{tpu_custom_call.1} parent=5 // pred_check
        %p181 = pneg %p180
      $region30: #{tpu_custom_call.1} parent=5 // pred_check_branch
        %183 = sbr.rel (%p181) target = $region32
      $region31: #{tpu_custom_call.1} parent=5 // pred_region
        // Predicated region
        $region33: #{tpu_custom_call.1} parent=31 // pred_check
          %p184 = pneg %p37
        $region34: #{tpu_custom_call.1} parent=31 // pred_check_branch
          %186 = sbr.rel (%p184) target = $region36
        $region35: #{tpu_custom_call.1} parent=31 // pred_region
          %s187 = sand.u32 %s27, 1
          %s188 = scalar_lea.sflag [#allocation3], %s187
          %s189 = sand.u32 %s27, 1
          %s190 = smul.addr %s189, 8
          %s191 = scalar_lea.vmem [#allocation2], %s190
          %s193 = ssub.s32 128, 128
          %194 = vsyncadd %s188, %s193
          %s195 = smul.addr %s17, 2
          %s196 = smul.addr %s195, 64
          %s197 = scalar_lea.hbm %s0, %s196
          %s199 = sshll.u32 %s191, 4
          %s200 = int_to_ptr.vmem [resolvable:$true] %s199
          %202 = dma.hbm_to_vmem [thread:$0]  %s197, 128, %s200, %s188
        $region36: #{tpu_custom_call.1} parent=31 // pred_fallthru
          _
      $region32: #{tpu_custom_call.1} parent=5 // pred_fallthru
        _
      %p203 = scmp.le.s32.totalorder 1, %s17
      %p204 = scmp.lt.s32.totalorder %s17, 3
      %p205 = pnand %p203, %p204
      %p206 = pneg %p205
      // Predicated region
      $region37: #{tpu_custom_call.1} parent=5 // pred_check
        _
      $region38: #{tpu_custom_call.1} parent=5 // pred_check_branch
        %208 = sbr.rel (%p205) target = $region40
      $region39: #{tpu_custom_call.1} parent=5 // pred_region
        %s209 = ssub.s32 %s17, 1
        %s210 = sand.u32 %s30, 1
        %s211 = scalar_lea.sflag [#allocation3], %s210
        %s212 = sand.u32 %s30, 1
        %s213 = smul.addr %s212, 8
        %s214 = scalar_lea.vmem [#allocation2], %s213
        // Predicated region
        $region41: #{tpu_custom_call.1} parent=39 // pred_check
          %p215 = pneg %p43
        $region42: #{tpu_custom_call.1} parent=39 // pred_check_branch
          %217 = sbr.rel (%p215) target = $region44
        $region43: #{tpu_custom_call.1} parent=39 // pred_region
          %218 = dma.done %s211, 128
        $region44: #{tpu_custom_call.1} parent=39 // pred_fallthru
          _
        %s219 = sand.u32 %s30, 1
        %s220 = scalar_lea.sflag [#allocation3], %s219
        %s221 = sand.u32 %s30, 1
        %s222 = smul.addr %s221, 8
        %s223 = scalar_lea.vmem [#allocation2], %s222
        %p224 = pneg %p43
        %p225 = pneg %p40
        %p226 = pneg %p64
        %p227 = pneg %p61
        %p228 = pneg %p85
        %p229 = pneg %p82
        %p230 = pneg %p106
        %p231 = pneg %p103
        %p232 = pneg %p127
        %p233 = pneg %p124
        %p234 = pneg %p153
        %p235 = pneg %p150
        %s236 = sand.u32 %s140, 1
        %s237 = scalar_lea.sflag [#allocation4], %s236
        %s238 = sand.u32 %s140, 1
        %s239 = smul.addr %s238, 8
        %s240 = scalar_lea.vmem [#allocation5], %s239
        %v241 = vld [vmem:[%s214] sm:$0xff]
        %v243 = vcombine.high %v241, %v241
        %vm245 = vcmask 1043456
        %v246 = vsel %vm245, %v241, -inf
        %v247 = vsel %vm245, %v243, -inf
        %v248 = vmax.f32 %v246, %v247
        %249 = vmax.xlane.f32.xlu0 %v248
        %v250 = vpop.xlane.xlu0 %249
        %v253 = vunpack.c.l.s4 839922192
        %v254 = vunpack.c.0.s8 %v253
        %v255 = vlaneseq
        %v256 = vshrl.u32 %v255, 7
        %v257 = vsub.s32 %v254, %v256
        %v258 = vrot.slane %v250, %v257
        %v260 = vsub.f32 %v241, %v258
        %v261 = vmul.f32 %v260, 1.442695
        %v262 = vpow.pop %v261
        %v264 = vcombine.high %v262, %v262
        %v266 = vsel %vm245, %v262, 0.0
        %v267 = vsel %vm245, %v264, 0.0
        %v268 = vadd.f32 %v266, %v267
        %269 = vadd.xlane.f32.xlu0 %v268
        %v270 = vpop.xlane.xlu0 %269
        %v271 = vmul.f32 %v262, %v260
        %v273 = vcombine.high %v271, %v271
        %v275 = vsel %vm245, %v271, 0.0
        %v276 = vsel %vm245, %v273, 0.0
        %v277 = vadd.f32 %v275, %v276
        %278 = vadd.xlane.f32.xlu0 %v277
        %v279 = vpop.xlane.xlu0 %278
        %v280 = vlog2.pop %v270
        %v281 = vmul.f32 %v280, 0.6931472
        %v282 = vrcp.pop %v270
        %v283 = vmul.f32 %v279, %v282
        %v284 = vsub.f32 %v281, %v283
        %v285 = vmul.f32 %v284, 1.442695
        %v286 = vld [vmem:[%s1] sm:$0xf]
        %v287 = vld [vmem:[%s2] sm:$0x1]
        %v289 = vlaneseq
        %v290 = vand.u32 %v289, 127
        %v291 = vlaneseq
        %v292 = vshrl.u32 %v291, 7
        %v293 = vsub.s32 %v290, %v292
        %v294 = vrot.slane %v285, %v293
        %vm295 = vcmask 31744
        %v296 = vsel %vm295, %v294, 0
        %v299 = vsel %vm245, %v286, 0
        %301 = vmatprep.subr.mxu0 0.0
        %302 = vmatpush1.msra.mxu0 %v299
        %303 = vmatprep.subr.mxu0 0.0
        %304 = vmatpush1.msra.mxu0 0.0
        %305 = vmatprep.subr.mxu0 0.0
        %306 = vmatpush1.msra.mxu0 0.0
        %307 = vmatprep.subr.mxu0 0.0
        %308 = vmatpush1.msra.mxu0 0.0
        %309 = vmatprep.subr.mxu0 0.0
        %310 = vmatpush1.msra.mxu0 0.0
        %311 = vmatprep.subr.mxu0 0.0
        %312 = vmatpush1.msra.mxu0 0.0
        %313 = vmatprep.subr.mxu0 0.0
        %314 = vmatpush1.msra.mxu0 0.0
        %315 = vmatprep.subr.mxu0 0.0
        %316 = vmatpush1.msra.mxu0 0.0
        %317 = vmatprep.subr.mxu0 0.0
        %318 = vmatpush1.msra.mxu0 0.0
        %319 = vmatprep.subr.mxu0 0.0
        %320 = vmatpush1.msra.mxu0 0.0
        %321 = vmatprep.subr.mxu0 0.0
        %322 = vmatpush1.msra.mxu0 0.0
        %323 = vmatprep.subr.mxu0 0.0
        %324 = vmatpush1.msra.mxu0 0.0
        %325 = vmatprep.subr.mxu0 0.0
        %326 = vmatpush1.msra.mxu0 0.0
        %327 = vmatprep.subr.mxu0 0.0
        %328 = vmatpush1.msra.mxu0 0.0
        %329 = vmatprep.subr.mxu0 0.0
        %330 = vmatpush1.msra.mxu0 0.0
        %331 = vmatprep.subr.mxu0 0.0
        %332 = vmatpush1.msra.mxu0 0.0
        %333 = vmatprep.subr.mxu0 0.0
        %334 = vmatpush1.msra.mxu0 0.0
        %335 = vmatprep.subr.mxu0 0.0
        %336 = vmatpush1.msra.mxu0 0.0
        %337 = vmatprep.subr.mxu0 0.0
        %338 = vmatpush1.msra.mxu0 0.0
        %339 = vmatprep.subr.mxu0 0.0
        %340 = vmatpush1.msra.mxu0 0.0
        %341 = vmatprep.subr.mxu0 0.0
        %342 = vmatpush1.msra.mxu0 0.0
        %343 = vmatprep.subr.mxu0 0.0
        %344 = vmatpush1.msra.mxu0 0.0
        %345 = vmatprep.subr.mxu0 0.0
        %346 = vmatpush1.msra.mxu0 0.0
        %347 = vmatprep.subr.mxu0 0.0
        %348 = vmatpush1.msra.mxu0 0.0
        %349 = vmatprep.subr.mxu0 0.0
        %350 = vmatpush1.msra.mxu0 0.0
        %351 = vmatprep.subr.mxu0 0.0
        %352 = vmatpush1.msra.mxu0 0.0
        %353 = vmatprep.subr.mxu0 0.0
        %354 = vmatpush1.msra.mxu0 0.0
        %355 = vmatprep.subr.mxu0 0.0
        %356 = vmatpush1.msra.mxu0 0.0
        %357 = vmatprep.subr.mxu0 0.0
        %358 = vmatpush1.msra.mxu0 0.0
        %359 = vmatprep.subr.mxu0 0.0
        %360 = vmatpush1.msra.mxu0 0.0
        %361 = vmatprep.subr.mxu0 0.0
        %362 = vmatpush1.msra.mxu0 0.0
        %363 = vmatprep.subr.mxu0 0.0
        %364 = vmatpush1.msra.mxu0 0.0
        %365 = vmatprep.mubr.f32.mxu0 0.0
        %366 = vmatmul.mubr.f32.gmra.mrb[0].mxu0 %v296
        %v367 = vpop.f32.mrb[0].mxu0
        %v368 = vadd.f32 %v287, %v367
        %v369 = vpop.f32.mrb[0].mxu0
        %370 = vdwg.mxu0
        %v371 = vld [vmem:[%s3] sm:$0x3]
        %v372 = vld [vmem:[%s4] sm:$0x1]
        %vm373 = vcmask 15360
        %v375 = vsel %vm373, %v368, 0
        %vm377 = vcmask 1041408
        %v379 = vsel %vm377, %v371, 0
        %381 = vmatprep.subr.mxu0 0.0
        %382 = vmatpush1.msra.mxu0 %v379
        %383 = vmatprep.subr.mxu0 0.0
        %384 = vmatpush1.msra.mxu0 0.0
        %385 = vmatprep.subr.mxu0 0.0
        %386 = vmatpush1.msra.mxu0 0.0
        %387 = vmatprep.subr.mxu0 0.0
        %388 = vmatpush1.msra.mxu0 0.0
        %389 = vmatprep.subr.mxu0 0.0
        %390 = vmatpush1.msra.mxu0 0.0
        %391 = vmatprep.subr.mxu0 0.0
        %392 = vmatpush1.msra.mxu0 0.0
        %393 = vmatprep.subr.mxu0 0.0
        %394 = vmatpush1.msra.mxu0 0.0
        %395 = vmatprep.subr.mxu0 0.0
        %396 = vmatpush1.msra.mxu0 0.0
        %397 = vmatprep.subr.mxu0 0.0
        %398 = vmatpush1.msra.mxu0 0.0
        %399 = vmatprep.subr.mxu0 0.0
        %400 = vmatpush1.msra.mxu0 0.0
        %401 = vmatprep.subr.mxu0 0.0
        %402 = vmatpush1.msra.mxu0 0.0
        %403 = vmatprep.subr.mxu0 0.0
        %404 = vmatpush1.msra.mxu0 0.0
        %405 = vmatprep.subr.mxu0 0.0
        %406 = vmatpush1.msra.mxu0 0.0
        %407 = vmatprep.subr.mxu0 0.0
        %408 = vmatpush1.msra.mxu0 0.0
        %409 = vmatprep.subr.mxu0 0.0
        %410 = vmatpush1.msra.mxu0 0.0
        %411 = vmatprep.subr.mxu0 0.0
        %412 = vmatpush1.msra.mxu0 0.0
        %413 = vmatprep.subr.mxu0 0.0
        %414 = vmatpush1.msra.mxu0 0.0
        %415 = vmatprep.subr.mxu0 0.0
        %416 = vmatpush1.msra.mxu0 0.0
        %417 = vmatprep.subr.mxu0 0.0
        %418 = vmatpush1.msra.mxu0 0.0
        %419 = vmatprep.subr.mxu0 0.0
        %420 = vmatpush1.msra.mxu0 0.0
        %421 = vmatprep.subr.mxu0 0.0
        %422 = vmatpush1.msra.mxu0 0.0
        %423 = vmatprep.subr.mxu0 0.0
        %424 = vmatpush1.msra.mxu0 0.0
        %425 = vmatprep.subr.mxu0 0.0
        %426 = vmatpush1.msra.mxu0 0.0
        %427 = vmatprep.subr.mxu0 0.0
        %428 = vmatpush1.msra.mxu0 0.0
        %429 = vmatprep.subr.mxu0 0.0
        %430 = vmatpush1.msra.mxu0 0.0
        %431 = vmatprep.subr.mxu0 0.0
        %432 = vmatpush1.msra.mxu0 0.0
        %433 = vmatprep.subr.mxu0 0.0
        %434 = vmatpush1.msra.mxu0 0.0
        %435 = vmatprep.subr.mxu0 0.0
        %436 = vmatpush1.msra.mxu0 0.0
        %437 = vmatprep.subr.mxu0 0.0
        %438 = vmatpush1.msra.mxu0 0.0
        %439 = vmatprep.subr.mxu0 0.0
        %440 = vmatpush1.msra.mxu0 0.0
        %441 = vmatprep.subr.mxu0 0.0
        %442 = vmatpush1.msra.mxu0 0.0
        %443 = vmatprep.subr.mxu0 0.0
        %444 = vmatpush1.msra.mxu0 0.0
        %445 = vmatprep.mubr.f32.mxu0 0.0
        %446 = vmatmul.mubr.f32.gmra.mrb[0].mxu0 %v375
        %v447 = vpop.f32.mrb[0].mxu0
        %v448 = vadd.f32 %v372, %v447
        %v449 = vpop.f32.mrb[0].mxu0
        %450 = vdwg.mxu0
        %v451 = vxor.u32 %v448, 2147483648
        %v452 = vmul.f32 %v451, 1.442695
        %v453 = vpow.pop %v452
        %v454 = vadd.f32 %v453, 1.0
        %v455 = vrcp.pop %v454
        %v456 = vmul.f32 1.0, %v455
        %v457 = vlaneseq
        %v458 = vshrl.u32 %v457, 7
        %v459 = vsub.s32 0, %v458
        %v460 = vrot.slane %v456, %v459
        %462 = vbcast.lane.b32.xlu0 %v460, 256
        %v463 = vpop.permute.xlu0 %462
        %v466 = vunpack.c.l.s4 839922192
        %v467 = vunpack.c.0.s8 %v466
        %v468 = vlaneseq
        %v469 = vshrl.u32 %v468, 7
        %v470 = vsub.s32 %v467, %v469
        %v471 = vrot.slane %v463, %v470
        %v473 = vmul.f32 %v241, %v471
        %474 = vst [vmem:[%s240] sm:$0xff] %v473
        %s475 = sand.u32 %s140, 1
        %s476 = scalar_lea.sflag [#allocation4], %s475
        %s477 = sand.u32 %s140, 1
        %s478 = smul.addr %s477, 8
        %s479 = scalar_lea.vmem [#allocation5], %s478
        // Predicated region
        $region45: #{tpu_custom_call.1} parent=39 // pred_check
          %p480 = pneg %p150
        $region46: #{tpu_custom_call.1} parent=39 // pred_check_branch
          %482 = sbr.rel (%p480) target = $region48
        $region47: #{tpu_custom_call.1} parent=39 // pred_region
          %s484 = ssub.s32 128, 128
          %485 = vsyncadd %s476, %s484
          %s486 = smul.addr %s22, 2
          %s487 = smul.addr %s486, 64
          %s488 = scalar_lea.hbm %s5, %s487
          %s490 = sshll.u32 %s479, 4
          %s491 = int_to_ptr.vmem [resolvable:$true] %s490
          %493 = dma.vmem_to_hbm [thread:$0]  %s491, 128, %s488, %s476
        $region48: #{tpu_custom_call.1} parent=39 // pred_fallthru
          _
      $region40: #{tpu_custom_call.1} parent=5 // pred_fallthru
        _
      %p494 = scmp.le.s32.totalorder 2, %s17
      // Predicated region
      $region49: #{tpu_custom_call.1} parent=5 // pred_check
        %p495 = pneg %p494
      $region50: #{tpu_custom_call.1} parent=5 // pred_check_branch
        %497 = sbr.rel (%p495) target = $region52
      $region51: #{tpu_custom_call.1} parent=5 // pred_region
        %s498 = ssub.s32 %s17, 2
        // Predicated region
        $region53: #{tpu_custom_call.1} parent=51 // pred_check
          %p499 = pneg %p156
        $region54: #{tpu_custom_call.1} parent=51 // pred_check_branch
          %501 = sbr.rel (%p499) target = $region56
        $region55: #{tpu_custom_call.1} parent=51 // pred_region
          %s502 = sand.u32 %s141, 1
          %s503 = scalar_lea.sflag [#allocation4], %s502
          %s504 = sand.u32 %s141, 1
          %s505 = smul.addr %s504, 8
          %s506 = scalar_lea.vmem [#allocation5], %s505
          %507 = dma.done %s503, 128
        $region56: #{tpu_custom_call.1} parent=51 // pred_fallthru
          _
      $region52: #{tpu_custom_call.1} parent=5 // pred_fallthru
        _
    $region6: #{tpu_custom_call.1} parent=1 // loop_footer
      %s21 = sadd.s32 1, %s17
    $region7: #{tpu_custom_call.1} parent=1 // loop_footer_branch
      %16 = sbr.rel target = $region3
    $region8: #{tpu_custom_call.1} parent=1 // loop_exit
      _
    %508 = vsyncpa [#allocation3], 1
    %s509 = scalar_lea.sflag [#allocation3], 1
    %510 = vsyncpa %s509, 1
    %511 = vsyncpa [#allocation4], 1
    %s512 = scalar_lea.sflag [#allocation4], 1
    %513 = vsyncpa %s512, 1

</llo_original>
